<compile_context>
chip_gen: v6e
topology: v6e:2x2x1
jax: 0.10.0
libtpu: 0.0.40
codegen_flags: <defaults>
</compile_context>

<pallas_src>
import jax
import jax.numpy as jnp
from jax.experimental import pallas as pl
from jax.experimental.pallas import tpu as pltpu


def _hyper_kernel(params_ref, x_ref, o_ref):
    # params_ref: SMEM (2,) f32 = [offset, value]
    offset = params_ref[0]
    value = params_ref[1]
    x = x_ref[...]  # native input dtype; compare promotes on the VPU (free slack)
    # (x >= offset) * value  ==  where(x >= offset, value, 0)
    o_ref[...] = jnp.where(x >= offset, value, jnp.float32(0.0))


def _round_up(n, m):
    return ((n + m - 1) // m) * m


def hyper(x, offset=0.5, value=None, *, target_block_elems=256 * 1024):
    """Pallas implementation of Hyper.forward (elementwise, any shape)."""
    if value is None:
        value = offset * 2.0

    orig_shape = x.shape
    total = 1
    for d in orig_shape:
        total *= int(d)

    # Pick a wide, lane-dense last dim that divides `total` exactly (avoids any
    # pad copy); prefer keeping rows >= 8 for full sublane utilization.
    lanes = None
    for cand in (4096, 2048, 1024, 512, 256, 128):
        if total % cand == 0 and total // cand >= 8:
            lanes = cand
            break
    if lanes is None:
        for cand in (4096, 2048, 1024, 512, 256, 128):
            if total % cand == 0:
                lanes = cand
                break

    x_flat = x.reshape(-1)  # keep native dtype: no wrapper upcast copy
    if lanes is None:
        # Irregular size: single jnp.pad to the next multiple of 128.
        lanes = 128
        padded_total = _round_up(total, lanes)
        x_flat = jnp.pad(x_flat, (0, padded_total - total))
    else:
        padded_total = total

    rows = padded_total // lanes
    x2d = x_flat.reshape(rows, lanes)

    # Block rows: ~1 MiB (f32) blocks (well under VMEM limits even on v7x with
    # in+out double-buffered ~4 MiB), multiple of 8 sublanes, and keep >= 2 grid
    # steps on medium/large tensors so v7x can shard across both TensorCores.
    tile_rows = max(8, target_block_elems // lanes)
    if rows > 8:
        tile_rows = min(tile_rows, _round_up(pl.cdiv(rows, 2), 8))
    tile_rows = min(tile_rows, _round_up(rows, 8))
    if tile_rows > rows:
        tile_rows = rows  # full-extent block (satisfies the tiling rule via full dim)

    grid = (pl.cdiv(rows, tile_rows),)  # partial last block handled by Pallas
    params = jnp.array([offset, value], dtype=jnp.float32)

    out2d = pl.pallas_call(
        _hyper_kernel,
        out_shape=jax.ShapeDtypeStruct((rows, lanes), jnp.float32),
        grid=grid,
        in_specs=[
            pl.BlockSpec(memory_space=pltpu.MemorySpace.SMEM),  # [offset, value]
            pl.BlockSpec((tile_rows, lanes), lambda i: (i, 0)),
        ],
        out_specs=pl.BlockSpec((tile_rows, lanes), lambda i: (i, 0)),
        compiler_params=pltpu.CompilerParams(
            dimension_semantics=("parallel",),
        ),
    )(params, x2d)

    out_flat = out2d.reshape(-1)
    if padded_total != total:
        out_flat = out_flat[:total]
    return out_flat.reshape(orig_shape)


if __name__ == "__main__":
    key = jax.random.PRNGKey(0)
    # Small NCHW input consistent with a conv-style activation module.
    x = jax.random.normal(key, (2, 4, 16, 16), dtype=jnp.float32)

    out = hyper(x, offset=0.5)  # value defaults to 2 * offset = 1.0
    out = jax.block_until_ready(out)

    # Reference in plain JAX (same semantics as torch: (x >= offset) * value).
    ref = (x >= 0.5).astype(jnp.float32) * 1.0
    assert out.shape == x.shape
    assert out.dtype == jnp.float32
    assert bool(jnp.all(out == ref))

    # Second call with different (offset, value): no recompile (SMEM scalars).
    out2 = jax.block_until_ready(hyper(x, offset=-0.25, value=3.0))
    ref2 = (x >= -0.25).astype(jnp.float32) * 3.0
    assert bool(jnp.all(out2 == ref2))

    print("KERNEL_OK")
</pallas_src>

<mosaic_0001>
module attributes {stable_mosaic.version = 11 : i64} {
  func.func @_hyper_kernel(%arg0: i32, %arg1: memref<2xf32, #tpu.memory_space<smem>>, %arg2: memref<8x256xf32, #tpu.memory_space<vmem>>, %arg3: memref<8x256xf32, #tpu.memory_space<vmem>>) attributes {dimension_semantics = [#tpu.dimension_semantics<parallel>], iteration_bounds = array<i64: 1>, scalar_prefetch = 0 : i64, scratch_operands = 0 : i64, tpu.core_type = #tpu.core_type<tc>, window_params = [{transform_indices = @transform_0, window_bounds = array<i64: 2>}, {transform_indices = @transform_1, window_bounds = array<i64: 8, 256>}, {transform_indices = @transform_2, window_bounds = array<i64: 8, 256>}]} {
    %c0 = arith.constant 0 : index
    %0 = memref.load %arg1[%c0] : memref<2xf32, #tpu.memory_space<smem>>
    %c1 = arith.constant 1 : index
    %1 = memref.load %arg1[%c1] : memref<2xf32, #tpu.memory_space<smem>>
    %c0_0 = arith.constant 0 : index
    %c0_1 = arith.constant 0 : index
    %2 = vector.load %arg2[%c0_0, %c0_1] : memref<8x256xf32, #tpu.memory_space<vmem>>, vector<8x256xf32>
    %3 = vector.broadcast %0 : f32 to vector<8x256xf32>
    %4 = arith.cmpf oge, %2, %3 : vector<8x256xf32>
    %cst = arith.constant 0.000000e+00 : f32
    %5 = vector.broadcast %1 : f32 to vector<8x256xf32>
    %6 = vector.broadcast %cst : f32 to vector<8x256xf32>
    %7 = arith.select %4, %5, %6 : vector<8x256xi1>, vector<8x256xf32>
    %c0_2 = arith.constant 0 : index
    %c0_3 = arith.constant 0 : index
    %8 = vector.load %arg3[%c0_2, %c0_3] : memref<8x256xf32, #tpu.memory_space<vmem>>, vector<8x256xf32>
    tpu.vector_store %arg3[%c0_2, %c0_3], %7 {strides = array<i32>} : memref<8x256xf32, #tpu.memory_space<vmem>>, vector<8x256xf32>,
    return
  }
  func.func @transform_0(%arg0: i32) -> i32 {
    %c0_i32 = arith.constant 0 : i32
    %c0_i32_0 = arith.constant 0 : i32
    return %c0_i32 : i32
  }
  func.func @transform_1(%arg0: i32) -> (i32, i32) {
    %c0_i32 = arith.constant 0 : i32
    %c0_i32_0 = arith.constant 0 : i32
    return %arg0, %c0_i32 : i32, i32
  }
  func.func @transform_2(%arg0: i32) -> (i32, i32) {
    %c0_i32 = arith.constant 0 : i32
    %c0_i32_0 = arith.constant 0 : i32
    return %arg0, %c0_i32 : i32, i32
  }
}

</mosaic_0001>

<llo_original>
// kernel: tpu_custom_call.1
$region0: #{tpu_custom_call.1}
  #allocation0 [shape = 'u32[]', space=smem, size = 0x4, offset = 0x4, fixed_abs, tag = 'smem constant byte address 0x4 - core index']
  #allocation1 [shape = 'u32[144,128]{1,0:T(1,128)}', space=vmem, size = 0x12000, scoped, tag = 'internal scratch']
  %s0 = inlined_call_operand.hbm [shape: f32[2], index: 0, kind: input, shape index: {}]
  %s1 = inlined_call_operand.hbm [shape: f32[8,256], index: 1, kind: input, shape index: {}]
  %s2 = inlined_call_operand.hbm [shape: f32[8,256], index: 2, kind: output, shape index: {}]
  %s3 = sld [smem:[#allocation0]]
  $region26: #{tpu_custom_call.1} parent=0
    _
  %s5 = ssub.s32 1, %s3
  %s6 = scalar_select 0, %s5, %s3
  $region1: #{tpu_custom_call.1} parent=0
    #allocation2 [shape = 'u8[512]{0}', space=smem, size = 0x200, scoped, tag = 'input window, operand 0, single buffered']
    #allocation3 [shape = 's32[1]{0}', space=sflag, size = 0x4, scoped, tag = 'scoped memory for tpu_custom_call.1']
    #allocation4 [shape = 's32[1]{0}', space=sflag, size = 0x4, scoped, tag = 'scoped memory for tpu_custom_call.1']
    #allocation5 [shape = 's32[1]{0}', space=sflag, size = 0x4, scoped, tag = 'scoped memory for tpu_custom_call.1']
    #allocation6 [shape = 'u8[8192]{0}', space=vmem, size = 0x2000, scoped, tag = 'input window, operand 1, single buffered']
    #allocation7 [shape = 'u8[8192]{0}', space=vmem, size = 0x2000, scoped, tag = 'output window, operand 0, single buffered']
    %7 = vsyncpa [#allocation5], 0
    %8 = vsyncpa [#allocation3], 0
    %9 = vsyncpa [#allocation4], 0
    // Predicated region
    $region2: #{tpu_custom_call.1} parent=1 // pred_check
      _
    $region3: #{tpu_custom_call.1} parent=1 // pred_check_branch
      %11 = sbr.rel (0) target = $region5
    $region4: #{tpu_custom_call.1} parent=1 // pred_region
      %s13 = ssub.s32 16, 16
      %14 = vsyncadd [#allocation5], %s13
      %17 = dma.hbm_to_smem %s0, 16, [#allocation2], [#allocation5]
    $region5: #{tpu_custom_call.1} parent=1 // pred_fallthru
      _
    // Predicated region
    $region6: #{tpu_custom_call.1} parent=1 // pred_check
      _
    $region7: #{tpu_custom_call.1} parent=1 // pred_check_branch
      %19 = sbr.rel (0) target = $region9
    $region8: #{tpu_custom_call.1} parent=1 // pred_region
      %s21 = ssub.s32 256, 256
      %22 = vsyncadd [#allocation3], %s21
      %s24 = sshll.u32 [#allocation6], 4
      %s25 = int_to_ptr.vmem [resolvable:$true] %s24
      %27 = dma.hbm_to_vmem [thread:$0]  %s1, 256, %s25, [#allocation3]
    $region9: #{tpu_custom_call.1} parent=1 // pred_fallthru
      _
    // Predicated region
    $region10: #{tpu_custom_call.1} parent=1 // pred_check
      _
    $region11: #{tpu_custom_call.1} parent=1 // pred_check_branch
      %29 = sbr.rel (0) target = $region13
    $region12: #{tpu_custom_call.1} parent=1 // pred_region
      %30 = dma.done [#allocation5], 16
    $region13: #{tpu_custom_call.1} parent=1 // pred_fallthru
      _
    // Predicated region
    $region14: #{tpu_custom_call.1} parent=1 // pred_check
      _
    $region15: #{tpu_custom_call.1} parent=1 // pred_check_branch
      %32 = sbr.rel (0) target = $region17
    $region16: #{tpu_custom_call.1} parent=1 // pred_region
      %33 = dma.done [#allocation3], 256
    $region17: #{tpu_custom_call.1} parent=1 // pred_fallthru
      _
    %34 = sfence
    %s35 = sld [smem:[#allocation2]]
    %s36 = sld [smem:[#allocation2 + $0x1]]
    %v37 = vld [vmem:[#allocation6] sm:$0xff]
    %v38 = vld [vmem:[#allocation6 + $0x8] sm:$0xff]
    %v39 = vstv %s35
    %vm40 = vcmp.ge.f32.partialorder %v37, %v39
    %vm41 = vcmp.ge.f32.partialorder %v38, %v39
    %v42 = vstv %s36
    %v43 = vsel %vm40, %v42, 0.0
    %v44 = vsel %vm41, %v42, 0.0
    %45 = vst [vmem:[#allocation7] sm:$0xff] %v43
    %46 = vst [vmem:[#allocation7 + $0x8] sm:$0xff] %v44
    // Predicated region
    $region18: #{tpu_custom_call.1} parent=1 // pred_check
      _
    $region19: #{tpu_custom_call.1} parent=1 // pred_check_branch
      %48 = sbr.rel (0) target = $region21
    $region20: #{tpu_custom_call.1} parent=1 // pred_region
      %s50 = ssub.s32 256, 256
      %51 = vsyncadd [#allocation4], %s50
      %s53 = sshll.u32 [#allocation7], 4
      %s54 = int_to_ptr.vmem [resolvable:$true] %s53
      %56 = dma.vmem_to_hbm [thread:$0]  %s54, 256, %s2, [#allocation4]
    $region21: #{tpu_custom_call.1} parent=1 // pred_fallthru
      _
    // Predicated region
    $region22: #{tpu_custom_call.1} parent=1 // pred_check
      _
    $region23: #{tpu_custom_call.1} parent=1 // pred_check_branch
      %58 = sbr.rel (0) target = $region25
    $region24: #{tpu_custom_call.1} parent=1 // pred_region
      %59 = dma.done [#allocation4], 256
    $region25: #{tpu_custom_call.1} parent=1 // pred_fallthru
      _
    %60 = vsyncpa [#allocation3], 1
    %61 = vsyncpa [#allocation4], 1
    %62 = vsyncpa [#allocation5], 1

</llo_original>
